<compile_context>
chip_gen: v6e
topology: v6e:2x2x1
jax: 0.10.0
libtpu: 0.0.40
codegen_flags: <defaults>
</compile_context>

<pallas_src>
import functools
import math

import jax
import jax.numpy as jnp
from jax.experimental import pallas as pl
from jax.experimental.pallas import tpu as pltpu

_LANE = 128
_SUBLANE = 8
_TILE_STEP = 512                      # streamed-W tile quantum (>=512, lane aligned)
_SMALL_BLOCK_BYTES = 2 << 20          # below this, single-block (no grid) path
_VMEM_LIMIT_BYTES = 32 << 20          # explicit scoped VMEM: > v5e's 16 MiB default,
                                      # well under v7x's 64 MiB physical
_TILE_VMEM_BUDGET = 24 << 20          # tile-sizing budget (headroom under the limit)


def _round_up(x, m):
    return ((x + m - 1) // m) * m


# ---------------------------------------------------------------------------
# Pallas kernels
# ---------------------------------------------------------------------------
def _hyper_linear_single_kernel(x_ref, w_ref, b_ref, o_ref):
    # Whole fused problem in one VMEM block:  y = x @ W + b
    acc = jnp.dot(x_ref[...], w_ref[...], preferred_element_type=jnp.float32)
    o_ref[...] = (acc + b_ref[...]).astype(o_ref.dtype)


def _hyper_linear_tiled_kernel(x_ref, w_ref, b_ref, o_ref, *, tn):
    # x_ref: [Bp, Din]      bf16 (resident)   w_ref: [Din, tn] bf16 (streamed)
    # b_ref: [1, Dout_pad]  f32  (resident)   o_ref: [Bp, tn]  f32
    j = pl.program_id(0)
    col = pl.multiple_of(j * tn, _LANE)
    acc = jnp.dot(x_ref[...], w_ref[...], preferred_element_type=jnp.float32)
    o_ref[...] = (acc + b_ref[:, pl.ds(col, tn)]).astype(o_ref.dtype)


def _choose_tile(dout_pad, din, bp):
    """Largest multiple-of-512 divisor of dout_pad that fits the VMEM budget
    while leaving >=2 column tiles (so v7x can shard them across its 2 TCs)."""
    per_col = 2 * (din * 2 + bp * 4)          # double-buffered W(bf16) + out(f32)
    tn_cap = max(_TILE_STEP,
                 (_TILE_VMEM_BUDGET // per_col) // _TILE_STEP * _TILE_STEP)
    best = None
    tn = _TILE_STEP
    while 2 * tn <= dout_pad and tn <= tn_cap:
        if dout_pad % tn == 0:
            best = tn
        tn += _TILE_STEP
    if best is not None:
        return best
    # Corner cases (tiny Dout_pad reached the tiled path, e.g. a huge batch).
    if dout_pad * (din * 2 + bp * 4) <= _TILE_VMEM_BUDGET:
        return dout_pad                       # single tile
    return _TILE_STEP if dout_pad % _TILE_STEP == 0 else _LANE
    # TODO(synk): add a batch (Bp) grid axis if control-signal batches ever
    # grow large enough that the output block dominates the VMEM budget.


def hyper_linear(x_bf16, w_bf16, b2_f32):
    """x: [Bp, Din] bf16, w: [Din, Dout_pad] bf16, b2: [1, Dout_pad] f32
    -> [Bp, Dout_pad] f32."""
    Bp, Din = x_bf16.shape
    Dout = w_bf16.shape[1]

    block_bytes = Bp * Din * 2 + Din * Dout * 2 + Dout * 4 + Bp * Dout * 4
    if block_bytes <= _SMALL_BLOCK_BYTES:
        # Fast path: whole problem fits in VMEM; grid/step overhead would
        # dominate, so run it as a single un-gridded block.
        return pl.pallas_call(
            _hyper_linear_single_kernel,
            out_shape=jax.ShapeDtypeStruct((Bp, Dout), jnp.float32),
            compiler_params=pltpu.CompilerParams(
                vmem_limit_bytes=_VMEM_LIMIT_BYTES),
        )(x_bf16, w_bf16, b2_f32)

    tn = _choose_tile(Dout, Din, Bp)
    grid = (Dout // tn,)
    kernel = functools.partial(_hyper_linear_tiled_kernel, tn=tn)
    return pl.pallas_call(
        kernel,
        out_shape=jax.ShapeDtypeStruct((Bp, Dout), jnp.float32),
        grid=grid,
        in_specs=[
            pl.BlockSpec((Bp, Din), lambda j: (0, 0)),      # x: resident, reused
            pl.BlockSpec((Din, tn), lambda j: (0, j)),      # W: streamed tiles
            pl.BlockSpec((1, Dout), lambda j: (0, 0)),      # bias: resident
        ],
        out_specs=pl.BlockSpec((Bp, tn), lambda j: (0, j)),
        compiler_params=pltpu.CompilerParams(
            # Independent column tiles -> shardable across v7x's 2 TCs.
            dimension_semantics=("parallel",),
            vmem_limit_bytes=_VMEM_LIMIT_BYTES),
    )(x_bf16, w_bf16, b2_f32)


# ---------------------------------------------------------------------------
# HyperNet parameter init: per-key nn.Linear-style init, fused + padded ONCE.
# ---------------------------------------------------------------------------
def init_hypernet_params(struct, key):
    keys = list(struct.keys())
    din = struct[keys[0]][0]
    for k in keys:
        assert struct[k][0] == din, "all heads share the control-signal dim"

    w_parts, b_parts, offsets = [], [], {}
    off = 0
    for name in keys:
        d_in, d_out = struct[name]
        key, kw, kb = jax.random.split(key, 3)
        bound = 1.0 / math.sqrt(d_in)
        # stored already transposed: [Din, Dout]
        w = jax.random.uniform(kw, (d_in, d_out), jnp.float32, -bound, bound)
        b = jax.random.uniform(kb, (d_out,), jnp.float32, -bound, bound)
        w_parts.append(w)
        b_parts.append(b)
        offsets[name] = (off, d_out)
        off += d_out

    dout_total = off
    # Pad to a multiple of the streamed-tile quantum (512) for anything big
    # enough to ever hit the tiled path; tiny fused outputs just lane-align.
    pad_to = _TILE_STEP if dout_total > _TILE_STEP else _LANE
    dout_pad = _round_up(max(dout_total, _LANE), pad_to)
    pad = dout_pad - dout_total

    w_cat = jnp.concatenate(w_parts, axis=1)                 # [Din, Dout_total]
    b_cat = jnp.concatenate(b_parts, axis=0)                 # [Dout_total]
    if pad:
        w_cat = jnp.pad(w_cat, ((0, 0), (0, pad)))
        b_cat = jnp.pad(b_cat, ((0, pad),))

    return {
        "w_cat": w_cat.astype(jnp.bfloat16),                 # [Din, Dout_pad] bf16
        "b_cat": b_cat.astype(jnp.float32).reshape(1, dout_pad),  # [1, Dout_pad] f32
        "offsets": offsets,                                   # key -> (col_off, dout)
        "din": din,
        "dout_pad": dout_pad,
    }


# ---------------------------------------------------------------------------
# HyperNet forward
# ---------------------------------------------------------------------------
def hypernet_forward(control_signal, fused):
    B, din = control_signal.shape
    assert din == fused["din"]

    # Pad batch to a sublane multiple (8) so output stores are unmasked.
    Bp = _round_up(max(B, _SUBLANE), _SUBLANE)
    x = control_signal.astype(jnp.bfloat16)
    if Bp != B:
        x = jnp.pad(x, ((0, Bp - B), (0, 0)))

    y = hyper_linear(x, fused["w_cat"], fused["b_cat"])       # [Bp, Dout_pad] f32

    return {k: y[:B, off:off + dout]
            for k, (off, dout) in fused["offsets"].items()}


# ---------------------------------------------------------------------------
# Reference (pure JAX, same bf16 weights / f32 accumulation) for correctness
# ---------------------------------------------------------------------------
def hypernet_forward_ref(control_signal, fused):
    x = control_signal.astype(jnp.bfloat16)
    y = jnp.dot(x, fused["w_cat"], preferred_element_type=jnp.float32)
    y = y + fused["b_cat"]
    return {k: y[:, off:off + dout]
            for k, (off, dout) in fused["offsets"].items()}


if __name__ == "__main__":
    root = jax.random.PRNGKey(0)
    k_params, k_x, k_params2, k_x2 = jax.random.split(root, 4)

    # --- small demo (single-block fast path), matching the module's usage ---
    hidden = 32
    struct = {
        "gamma": (hidden, 64),
        "beta":  (hidden, 64),
        "alpha": (hidden, 16),
    }
    fused = init_hypernet_params(struct, k_params)

    batch = 2
    control_signal = jax.random.normal(k_x, (batch, hidden), jnp.float32)

    out = hypernet_forward(control_signal, fused)
    out = jax.tree_util.tree_map(jax.block_until_ready, out)
    ref = hypernet_forward_ref(control_signal, fused)
    for k in struct:
        assert out[k].shape == (batch, struct[k][1]), (k, out[k].shape)
        assert jnp.allclose(out[k], ref[k], atol=1e-4, rtol=1e-4), k

    # --- larger fused output to exercise the tiled / pipelined path ---------
    struct_big = {"w_big": (hidden, 24 * 1024)}
    fused_big = init_hypernet_params(struct_big, k_params2)
    x_big = jax.random.normal(k_x2, (batch, hidden), jnp.float32)

    out_big = hypernet_forward(x_big, fused_big)
    out_big = jax.tree_util.tree_map(jax.block_until_ready, out_big)
    ref_big = hypernet_forward_ref(x_big, fused_big)
    assert out_big["w_big"].shape == (batch, struct_big["w_big"][1])
    assert jnp.allclose(out_big["w_big"], ref_big["w_big"], atol=1e-4, rtol=1e-4)

    print("KERNEL_OK")
</pallas_src>

<mosaic_0001>
module attributes {stable_mosaic.version = 11 : i64} {
  func.func @_hyper_linear_single_kernel(%arg0: memref<8x32xbf16, #tpu.memory_space<vmem>>, %arg1: memref<32x256xbf16, #tpu.memory_space<vmem>>, %arg2: memref<1x256xf32, #tpu.memory_space<vmem>>, %arg3: memref<8x256xf32, #tpu.memory_space<vmem>>) attributes {dimension_semantics = [], scalar_prefetch = 0 : i64, scratch_operands = 0 : i64, tpu.core_type = #tpu.core_type<tc>} {
    %c0 = arith.constant 0 : index
    %c0_0 = arith.constant 0 : index
    %0 = vector.load %arg0[%c0, %c0_0] : memref<8x32xbf16, #tpu.memory_space<vmem>>, vector<8x32xbf16>
    %c0_1 = arith.constant 0 : index
    %c0_2 = arith.constant 0 : index
    %1 = vector.load %arg1[%c0_1, %c0_2] : memref<32x256xbf16, #tpu.memory_space<vmem>>, vector<32x256xbf16>
    %cst = arith.constant dense<0.000000e+00> : vector<8x256xf32>
    %2 = tpu.matmul %0, %1, %cst {dimension_numbers = #tpu.dot_dimension_numbers<[1], [0], [0], [1], [0, 0, 1, 1], [], []>} : vector<8x32xbf16>, vector<32x256xbf16>, vector<8x256xf32> -> vector<8x256xf32>
    %c0_3 = arith.constant 0 : index
    %c0_4 = arith.constant 0 : index
    %3 = vector.load %arg2[%c0_3, %c0_4] : memref<1x256xf32, #tpu.memory_space<vmem>>, vector<1x256xf32>
    %4 = vector.broadcast %3 : vector<1x256xf32> to vector<8x256xf32>
    %5 = arith.addf %2, %4 : vector<8x256xf32>
    %c0_5 = arith.constant 0 : index
    %c0_6 = arith.constant 0 : index
    %6 = vector.load %arg3[%c0_5, %c0_6] : memref<8x256xf32, #tpu.memory_space<vmem>>, vector<8x256xf32>
    tpu.vector_store %arg3[%c0_5, %c0_6], %5 {strides = array<i32>} : memref<8x256xf32, #tpu.memory_space<vmem>>, vector<8x256xf32>,
    return
  }
}

</mosaic_0001>

<llo_original>
// kernel: tpu_custom_call.1
$region0: #{tpu_custom_call.1}
  #allocation0 [shape = 'u32[]', space=smem, size = 0x4, offset = 0x4, fixed_abs, tag = 'smem constant byte address 0x4 - core index']
  #allocation1 [shape = 'u32[144,128]{1,0:T(1,128)}', space=vmem, size = 0x12000, scoped, tag = 'internal scratch']
  %s0 = inlined_call_operand.hbm [shape: bf16[8,32], index: 0, kind: input, shape index: {}]
  %s1 = inlined_call_operand.hbm [shape: bf16[32,256], index: 1, kind: input, shape index: {}]
  %s2 = inlined_call_operand.vmem [shape: f32[1,256], index: 2, kind: input, shape index: {}]
  %s3 = inlined_call_operand.hbm [shape: f32[8,256], index: 3, kind: output, shape index: {}]
  %s4 = sld [smem:[#allocation0]]
  $region30: #{tpu_custom_call.1} parent=0
    _
  %s6 = ssub.s32 1, %s4
  %s7 = scalar_select 0, %s6, %s4
  $region1: #{tpu_custom_call.1} parent=0
    #allocation2 [shape = 'u8[2048]{0}', space=vmem, size = 0x800, scoped, tag = 'input window, operand 0, single buffered']
    #allocation3 [shape = 's32[1]{0}', space=sflag, size = 0x4, scoped, tag = 'scoped memory for tpu_custom_call.1']
    #allocation4 [shape = 's32[1]{0}', space=sflag, size = 0x4, scoped, tag = 'scoped memory for tpu_custom_call.1']
    #allocation5 [shape = 'u8[16384]{0}', space=vmem, size = 0x4000, scoped, tag = 'input window, operand 1, single buffered']
    #allocation6 [shape = 's32[1]{0}', space=sflag, size = 0x4, scoped, tag = 'scoped memory for tpu_custom_call.1']
    #allocation7 [shape = 'u8[8192]{0}', space=vmem, size = 0x2000, scoped, tag = 'output window, operand 0, single buffered']
    %8 = vsyncpa [#allocation3], 0
    %9 = vsyncpa [#allocation6], 0
    %10 = vsyncpa [#allocation4], 0
    // Predicated region
    $region2: #{tpu_custom_call.1} parent=1 // pred_check
      _
    $region3: #{tpu_custom_call.1} parent=1 // pred_check_branch
      %12 = sbr.rel (0) target = $region5
    $region4: #{tpu_custom_call.1} parent=1 // pred_region
      %s14 = ssub.s32 64, 64
      %15 = vsyncadd [#allocation3], %s14
      %s17 = sshll.u32 [#allocation2], 4
      %s18 = int_to_ptr.vmem [resolvable:$true] %s17
      %20 = dma.hbm_to_vmem [thread:$0]  %s0, 64, %s18, [#allocation3]
    $region5: #{tpu_custom_call.1} parent=1 // pred_fallthru
      _
    // Predicated region
    $region6: #{tpu_custom_call.1} parent=1 // pred_check
      _
    $region7: #{tpu_custom_call.1} parent=1 // pred_check_branch
      %22 = sbr.rel (0) target = $region9
    $region8: #{tpu_custom_call.1} parent=1 // pred_region
      %s24 = ssub.s32 512, 512
      %25 = vsyncadd [#allocation6], %s24
      %s26 = sshll.u32 [#allocation5], 4
      %s27 = int_to_ptr.vmem [resolvable:$true] %s26
      %32 = dma.hbm_to_vmem [thread:$0]  %s1, 512, %s27, [#allocation6], 128, 128, 8
    $region9: #{tpu_custom_call.1} parent=1 // pred_fallthru
      _
    // Predicated region
    $region10: #{tpu_custom_call.1} parent=1 // pred_check
      _
    $region11: #{tpu_custom_call.1} parent=1 // pred_check_branch
      %34 = sbr.rel (0) target = $region13
    $region12: #{tpu_custom_call.1} parent=1 // pred_region
      _
    $region13: #{tpu_custom_call.1} parent=1 // pred_fallthru
      _
    // Predicated region
    $region14: #{tpu_custom_call.1} parent=1 // pred_check
      _
    $region15: #{tpu_custom_call.1} parent=1 // pred_check_branch
      %36 = sbr.rel (0) target = $region17
    $region16: #{tpu_custom_call.1} parent=1 // pred_region
      %37 = dma.done [#allocation3], 64
    $region17: #{tpu_custom_call.1} parent=1 // pred_fallthru
      _
    // Predicated region
    $region18: #{tpu_custom_call.1} parent=1 // pred_check
      _
    $region19: #{tpu_custom_call.1} parent=1 // pred_check_branch
      %39 = sbr.rel (0) target = $region21
    $region20: #{tpu_custom_call.1} parent=1 // pred_region
      %40 = dma.done [#allocation6], 512
    $region21: #{tpu_custom_call.1} parent=1 // pred_fallthru
      _
    %v42 = vld [vmem:[#allocation2] sm:$0xf]
    %v43 = vld [vmem:[#allocation5] sm:$0xff]
    %v44 = vld [vmem:[#allocation5 + $0x8] sm:$0xff]
    %v45 = vld [vmem:[#allocation5 + $0x10] sm:$0xff]
    %v46 = vld [vmem:[#allocation5 + $0x18] sm:$0xff]
    %v47 = vld [vmem:[%s2] sm:$0x3]
    %v49 = vlaneseq
    %v50 = vshrl.u32 %v49, 7
    %v51 = vsub.s32 0, %v50
    %v52 = vrot.slane %v47, %v51
    %v53 = vlaneseq
    %v54 = vshrl.u32 %v53, 7
    %v55 = vsub.s32 1, %v54
    %v56 = vrot.slane %v47, %v55
    %v63 = vunpack.c.l.b16 %v43
    %v64 = vunpack.c.h.b16 %v43
    %v65 = vunpack.c.l.b16 %v44
    %v66 = vunpack.c.h.b16 %v44
    %v67 = vunpack.c.l.b16 %v45
    %v68 = vunpack.c.h.b16 %v45
    %v69 = vunpack.c.l.b16 %v46
    %v70 = vunpack.c.h.b16 %v46
    %v71 = vpack.c.b16 %v65, %v63
    %v72 = vpack.c.b16 %v66, %v64
    %v73 = vpack.c.b16 %v69, %v67
    %v74 = vpack.c.b16 %v70, %v68
    %vm79 = vcmask 261120
    %v81 = vsel %vm79, %v42, 0
    %83 = vmatprep.subr.bf16.mxu0 0
    %84 = vmatpush1.bf16.msra.mxu0 0
    %85 = vmatprep.subr.bf16.mxu0 0
    %86 = vmatpush1.bf16.msra.mxu0 0
    %87 = vmatprep.subr.bf16.mxu0 0
    %88 = vmatpush1.bf16.msra.mxu0 0
    %89 = vmatprep.subr.bf16.mxu0 0
    %90 = vmatpush1.bf16.msra.mxu0 0
    %91 = vmatprep.subr.bf16.mxu0 0
    %92 = vmatpush1.bf16.msra.mxu0 0
    %93 = vmatprep.subr.bf16.mxu0 0
    %94 = vmatpush1.bf16.msra.mxu0 0
    %95 = vmatprep.subr.bf16.mxu0 %v74
    %96 = vmatpush1.bf16.msra.mxu0 %v73
    %97 = vmatprep.subr.bf16.mxu0 %v72
    %98 = vmatpush1.bf16.msra.mxu0 %v71
    %99 = vmatprep.subr.bf16.mxu0 0
    %100 = vmatpush2.bf16.msra.mxu0 0
    %101 = vmatprep.subr.bf16.mxu0 0
    %102 = vmatpush2.bf16.msra.mxu0 0
    %103 = vmatprep.subr.bf16.mxu0 0
    %104 = vmatpush2.bf16.msra.mxu0 0
    %105 = vmatprep.subr.bf16.mxu0 0
    %106 = vmatpush2.bf16.msra.mxu0 0
    %107 = vmatprep.subr.bf16.mxu0 0
    %108 = vmatpush2.bf16.msra.mxu0 0
    %109 = vmatprep.subr.bf16.mxu0 0
    %110 = vmatpush2.bf16.msra.mxu0 0
    %111 = vmatprep.subr.bf16.mxu0 0
    %112 = vmatpush2.bf16.msra.mxu0 0
    %113 = vmatprep.subr.bf16.mxu0 0
    %114 = vmatpush2.bf16.msra.mxu0 0
    %115 = vmatprep.mubr.bf16.mxu0 0
    %116 = vmatmul.mubr.bf16.gmra.mxu0 %v81
    %v117 = vpop.f32.mrf.mxu0
    %v118 = vadd.f32 %v52, %v117
    %v119 = vpop.f32.mrf.mxu0
    %v120 = vadd.f32 %v56, %v119
    %v121 = vpop.f32.mrf.mxu0
    %v122 = vpop.f32.mrf.mxu0
    %123 = vdwg.mxu0
    %124 = vst [vmem:[#allocation7] sm:$0xff] %v118
    %125 = vst [vmem:[#allocation7 + $0x8] sm:$0xff] %v120
    // Predicated region
    $region22: #{tpu_custom_call.1} parent=1 // pred_check
      _
    $region23: #{tpu_custom_call.1} parent=1 // pred_check_branch
      %127 = sbr.rel (0) target = $region25
    $region24: #{tpu_custom_call.1} parent=1 // pred_region
      %s129 = ssub.s32 256, 256
      %130 = vsyncadd [#allocation4], %s129
      %s132 = sshll.u32 [#allocation7], 4
      %s133 = int_to_ptr.vmem [resolvable:$true] %s132
      %135 = dma.vmem_to_hbm [thread:$0]  %s133, 256, %s3, [#allocation4]
    $region25: #{tpu_custom_call.1} parent=1 // pred_fallthru
      _
    // Predicated region
    $region26: #{tpu_custom_call.1} parent=1 // pred_check
      _
    $region27: #{tpu_custom_call.1} parent=1 // pred_check_branch
      %137 = sbr.rel (0) target = $region29
    $region28: #{tpu_custom_call.1} parent=1 // pred_region
      %138 = dma.done [#allocation4], 256
    $region29: #{tpu_custom_call.1} parent=1 // pred_fallthru
      _
    %139 = vsyncpa [#allocation3], 1
    %140 = vsyncpa [#allocation6], 1
    %141 = vsyncpa [#allocation4], 1

</llo_original>
